<compile_context>
chip_gen: v7x
topology: tpu7x:2x2x1
jax: 0.10.0
libtpu: 0.0.40
codegen_flags: <defaults>
</compile_context>

<pallas_src>
import math
import functools

import jax
import jax.numpy as jnp
from jax import lax
from jax.experimental import pallas as pl
from jax.experimental.pallas import tpu as pltpu


def _gather_embed_kernel(ids_ref, table_ref, pe_ref, out_ref, row_buf, sems, *,
                         tokens_per_tile):
    """One grid step produces a (T, D) tile of output token embeddings.

    ids_ref  : (P,)   int32        SMEM  (scalar-prefetched flattened token ids)
    table_ref: (V, D) table dtype  HBM   (pre-scaled by sqrt(D); raw ref, manual DMA)
    pe_ref   : (T, D) float32      VMEM  (positional-encoding rows for this tile)
    out_ref  : (T, D) float32      VMEM  (output tile)
    row_buf  : (T, D) table dtype  VMEM scratch (gather staging buffer)
    sems     : (T,)   DMA semaphores (one per in-flight row copy)
    """
    base = pl.program_id(0) * tokens_per_tile

    # Issue every row gather of this tile before waiting on any of them so the
    # HBM DMAs overlap each other (and the previous tile's output writeback).
    @pl.loop(0, tokens_per_tile)
    def _issue(i):
        tok = ids_ref[base + i]
        pltpu.make_async_copy(
            table_ref.at[pl.ds(tok, 1), :],
            row_buf.at[pl.ds(i, 1), :],
            sems.at[i],
        ).start()

    @pl.loop(0, tokens_per_tile)
    def _wait(i):
        pltpu.make_async_copy(
            table_ref.at[pl.ds(0, 1), :],   # shape-only placeholder for the wait
            row_buf.at[pl.ds(i, 1), :],
            sems.at[i],
        ).wait()

    # Epilogue: upcast (no-op for an f32 table, real work if stored as bf16) and
    # add the positional encoding. sqrt(D) is already folded into the table.
    out_ref[...] = row_buf[...].astype(jnp.float32) + pe_ref[...]
    # TODO(synk): dropout is p=0 (identity); stochastic dropout masking not implemented.


def make_positional_encoding(max_len, dim):
    """Same construction as PositionalEncoding.__init__ (without the batch axis)."""
    if dim % 2 != 0:
        raise ValueError(
            "Cannot use sin/cos positional encoding with odd dim (got dim={:d})".format(dim))
    position = jnp.arange(max_len, dtype=jnp.float32)[:, None]            # (max_len, 1)
    div_term = jnp.exp(
        jnp.arange(0, dim, 2, dtype=jnp.float32) * (-(math.log(10000.0) / dim)))
    ang = position * div_term                                             # (max_len, dim//2)
    pe = jnp.zeros((max_len, dim), dtype=jnp.float32)
    pe = pe.at[:, 0::2].set(jnp.sin(ang))
    pe = pe.at[:, 1::2].set(jnp.cos(ang))
    return pe


def embeddings_forward(source, word_table, pe, step=0, tokens_per_tile=256):
    """Pallas equivalent of Embeddings.forward.

    source:     (L, B, 1)     int32   token indices (len, batch, nfeat)
    word_table: (V, D)        float32 (or bf16) embedding weights (padding row zeroed)
    pe:         (max_len, D)  float32 positional-encoding table
    returns:    (L, B, D)     float32
    """
    L, B, _ = source.shape
    V, D = word_table.shape

    if pe.shape[0] < step + L:
        # Mirrors SequenceTooLongError in the original module.
        raise ValueError(
            f"Sequence is {L + step} but PositionalEncoding is limited to {pe.shape[0]}.")

    n_tok = L * B
    # Token tile: multiple of 8 sublanes, no larger than (rounded-up) token count.
    # Use 256-1024 in production; the demo passes 8 to exercise >1 grid step.
    t = max(8, ((min(tokens_per_tile, n_tok) + 7) // 8) * 8)
    num_tiles = pl.cdiv(n_tok, t)
    padded = num_tiles * t

    # Flatten ids token-major (row = l*B + b) and clamp so a bad id can never
    # become an out-of-bounds HBM DMA.
    ids = source[..., 0].astype(jnp.int32).reshape(-1)                    # (L*B,)
    ids = jnp.clip(ids, 0, V - 1)
    if padded != n_tok:
        ids = jnp.pad(ids, (0, padded - n_tok))

    # Positional encoding rows for this step, broadcast over batch and laid out
    # in the same flattened token order as ids / the output.
    pe_slice = lax.dynamic_slice_in_dim(pe, step, L, axis=0)              # (L, D)
    pe_flat = jnp.repeat(pe_slice, B, axis=0)                             # (L*B, D)
    if padded != n_tok:
        pe_flat = jnp.pad(pe_flat, ((0, padded - n_tok), (0, 0)))

    # Fold sqrt(D) into the table once (bitwise-identical to scaling after the
    # gather). Storing the table as bf16 here would halve the dominant HBM
    # stream; kept in the caller's dtype (f32 in the demo) for exactness.
    table_scaled = (word_table * jnp.float32(math.sqrt(D))).astype(word_table.dtype)

    kernel = functools.partial(_gather_embed_kernel, tokens_per_tile=t)

    out_flat = pl.pallas_call(
        kernel,
        out_shape=jax.ShapeDtypeStruct((padded, D), jnp.float32),
        grid_spec=pltpu.PrefetchScalarGridSpec(
            num_scalar_prefetch=1,                       # ids -> SMEM
            grid=(num_tiles,),
            in_specs=[
                pl.BlockSpec(memory_space=pl.ANY),       # table stays in HBM (manual DMA)
                pl.BlockSpec((t, D), lambda i, ids: (i, 0)),   # PE tile
            ],
            out_specs=pl.BlockSpec((t, D), lambda i, ids: (i, 0)),
            scratch_shapes=[
                pltpu.VMEM((t, D), table_scaled.dtype),  # row gather staging buffer
                pltpu.SemaphoreType.DMA((t,)),           # one sem per in-flight row copy
            ],
        ),
        compiler_params=pltpu.CompilerParams(
            dimension_semantics=("parallel",)),          # independent token tiles
    )(ids, table_scaled, pe_flat)

    return out_flat[:n_tok].reshape(L, B, D)


if __name__ == "__main__":
    # Small, module-consistent shapes (D chosen lane-dense = 128).
    L, B, NFEAT = 8, 2, 1          # (len, batch, nfeat)
    V, D = 64, 128                 # word_vocab_size, word_vec_size
    PAD_IDX = 1
    MAX_LEN = 5000

    key = jax.random.PRNGKey(0)
    k_tab, k_src = jax.random.split(key)

    # Deterministic parameter init; nn.Embedding zeroes the padding_idx row.
    word_table = jax.random.normal(k_tab, (V, D), dtype=jnp.float32)
    word_table = word_table.at[PAD_IDX, :].set(0.0)

    pe = make_positional_encoding(MAX_LEN, D)

    source = jax.random.randint(k_src, (L, B, NFEAT), 0, V, dtype=jnp.int32)

    out = embeddings_forward(source, word_table, pe, step=0, tokens_per_tile=8)
    out = jax.block_until_ready(out)

    # Pure-JAX reference for correctness.
    ids = source[..., 0]
    ref = word_table[ids] * math.sqrt(D) + pe[:L][:, None, :]
    assert out.shape == (L, B, D)
    assert jnp.allclose(out, ref, atol=1e-5, rtol=1e-5), float(jnp.max(jnp.abs(out - ref)))

    print("KERNEL_OK")
</pallas_src>

<mosaic_0001>
module attributes {stable_mosaic.version = 11 : i64} {
  func.func @_gather_embed_kernel(%arg0: i32, %arg1: memref<16xi32, #tpu.memory_space<smem>>, %arg2: memref<64x128xf32, #tpu.memory_space<any>>, %arg3: memref<8x128xf32, #tpu.memory_space<vmem>>, %arg4: memref<8x128xf32, #tpu.memory_space<vmem>>, %arg5: memref<8x128xf32, #tpu.memory_space<vmem>>, %arg6: memref<8x!tpu.dma_semaphore, #tpu.memory_space<semaphore_mem>>) attributes {dimension_semantics = [#tpu.dimension_semantics<parallel>], iteration_bounds = array<i64: 2>, scalar_prefetch = 1 : i64, scratch_operands = 2 : i64, tpu.core_type = #tpu.core_type<tc>, window_params = [{}, {transform_indices = @transform_1, window_bounds = array<i64: 8, 128>}, {transform_indices = @transform_2, window_bounds = array<i64: 8, 128>}]} {
    %c8_i32 = arith.constant 8 : i32
    %0 = arith.muli %arg0, %c8_i32 : i32
    %c0_i32 = arith.constant 0 : i32
    %c8_i32_0 = arith.constant 8 : i32
    %1 = arith.addi %c0_i32, %c8_i32_0 : i32
    %c1_i32 = arith.constant 1 : i32
    scf.for %arg7 = %c0_i32 to %1 step %c1_i32  : i32 {
      %c1_i32_11 = arith.constant 1 : i32
      %7 = arith.muli %arg7, %c1_i32_11 : i32
      %c0_i32_12 = arith.constant 0 : i32
      %8 = arith.addi %c0_i32_12, %7 : i32
      %9 = arith.addi %0, %8 : i32
      %10 = arith.index_cast %9 : i32 to index
      %11 = memref.load %arg1[%10] : memref<16xi32, #tpu.memory_space<smem>>
      %c0_i32_13 = arith.constant 0 : i32
      %12 = tpu.memref_slice %arg2[%11, %c0_i32_13] : memref<64x128xf32, #tpu.memory_space<any>> -> memref<1x128xf32, #tpu.memory_space<any>>
      %c0_i32_14 = arith.constant 0 : i32
      %13 = tpu.memref_slice %arg5[%8, %c0_i32_14] : memref<8x128xf32, #tpu.memory_space<vmem>> -> memref<1x128xf32, #tpu.memory_space<vmem>>
      %14 = tpu.memref_slice %arg6[%8] : memref<8x!tpu.dma_semaphore, #tpu.memory_space<semaphore_mem>> -> memref<1x!tpu.dma_semaphore, #tpu.memory_space<semaphore_mem>>
      %15 = tpu.memref_squeeze %14 : memref<1x!tpu.dma_semaphore, #tpu.memory_space<semaphore_mem>> -> memref<!tpu.dma_semaphore, #tpu.memory_space<semaphore_mem>>
      tpu.enqueue_dma source(%12 : memref<1x128xf32, #tpu.memory_space<any>>) target(%13 : memref<1x128xf32, #tpu.memory_space<vmem>>) target_semaphore(%15 : memref<!tpu.dma_semaphore, #tpu.memory_space<semaphore_mem>>)
    }
    %c8_i32_1 = arith.constant 8 : i32
    %c0_i32_2 = arith.constant 0 : i32
    %c8_i32_3 = arith.constant 8 : i32
    %2 = arith.addi %c0_i32_2, %c8_i32_3 : i32
    %c1_i32_4 = arith.constant 1 : i32
    scf.for %arg7 = %c0_i32_2 to %2 step %c1_i32_4  : i32 {
      %c1_i32_11 = arith.constant 1 : i32
      %7 = arith.muli %arg7, %c1_i32_11 : i32
      %c0_i32_12 = arith.constant 0 : i32
      %8 = arith.addi %c0_i32_12, %7 : i32
      %c0_i32_13 = arith.constant 0 : i32
      %c0_i32_14 = arith.constant 0 : i32
      %9 = tpu.memref_slice %arg2[%c0_i32_13, %c0_i32_14] : memref<64x128xf32, #tpu.memory_space<any>> -> memref<1x128xf32, #tpu.memory_space<any>>
      %c0_i32_15 = arith.constant 0 : i32
      %10 = tpu.memref_slice %arg5[%8, %c0_i32_15] : memref<8x128xf32, #tpu.memory_space<vmem>> -> memref<1x128xf32, #tpu.memory_space<vmem>>
      %11 = tpu.memref_slice %arg6[%8] : memref<8x!tpu.dma_semaphore, #tpu.memory_space<semaphore_mem>> -> memref<1x!tpu.dma_semaphore, #tpu.memory_space<semaphore_mem>>
      %12 = tpu.memref_squeeze %11 : memref<1x!tpu.dma_semaphore, #tpu.memory_space<semaphore_mem>> -> memref<!tpu.dma_semaphore, #tpu.memory_space<semaphore_mem>>
      tpu.wait_dma2 semaphore(%12 : memref<!tpu.dma_semaphore, #tpu.memory_space<semaphore_mem>>) src(%9 : memref<1x128xf32, #tpu.memory_space<any>>) dst(%10 : memref<1x128xf32, #tpu.memory_space<vmem>>)
    }
    %c8_i32_5 = arith.constant 8 : i32
    %c0 = arith.constant 0 : index
    %c0_6 = arith.constant 0 : index
    %3 = vector.load %arg5[%c0, %c0_6] : memref<8x128xf32, #tpu.memory_space<vmem>>, vector<8x128xf32>
    %c0_7 = arith.constant 0 : index
    %c0_8 = arith.constant 0 : index
    %4 = vector.load %arg3[%c0_7, %c0_8] : memref<8x128xf32, #tpu.memory_space<vmem>>, vector<8x128xf32>
    %5 = arith.addf %3, %4 : vector<8x128xf32>
    %c0_9 = arith.constant 0 : index
    %c0_10 = arith.constant 0 : index
    %6 = vector.load %arg4[%c0_9, %c0_10] : memref<8x128xf32, #tpu.memory_space<vmem>>, vector<8x128xf32>
    tpu.vector_store %arg4[%c0_9, %c0_10], %5 {strides = array<i32>} : memref<8x128xf32, #tpu.memory_space<vmem>>, vector<8x128xf32>,
    return
  }
  func.func @transform_1(%arg0: i32, %arg1: memref<16xi32, #tpu.memory_space<smem>>) -> (i32, i32) {
    %c0_i32 = arith.constant 0 : i32
    %c0_i32_0 = arith.constant 0 : i32
    return %arg0, %c0_i32 : i32, i32
  }
  func.func @transform_2(%arg0: i32, %arg1: memref<16xi32, #tpu.memory_space<smem>>) -> (i32, i32) {
    %c0_i32 = arith.constant 0 : i32
    %c0_i32_0 = arith.constant 0 : i32
    return %arg0, %c0_i32 : i32, i32
  }
}

</mosaic_0001>

<llo_original>
// kernel: tpu_custom_call.1
$region0: #{tpu_custom_call.1}
  #allocation0 [shape = 'u32[]', space=smem, size = 0x4, offset = 0x4, fixed_abs, tag = 'smem constant byte address 0x4 - core index']
  #allocation1 [shape = 'u32[144,128]{1,0:T(1,128)}', space=vmem, size = 0x12000, scoped, tag = 'internal scratch']
  #allocation2 [shape = 'f32[8,128]{1,0:T(8,128)}', space=vmem, size = 0x1000, scoped, tag = 'scratch operand']
  #allocation3 [shape = 's32[8]{0}', space=sflag, size = 0x20, scoped, tag = 'scratch operand']
  #allocation4 [shape = 's32[1]{0}', space=sflag, size = 0x4, scoped, tag = 'scoped memory for tpu_custom_call.1']
  #allocation5 [shape = 'u8[512]{0}', space=smem, size = 0x200, scoped, tag = 'prefetched SMEM operand 0']
  #allocation10 [shape = 's32[]', space=sflag, size = 0x4, offset = 0, fixed_abs, tag = 'sflag constant byte address 0x0 - dummy sync flag']
  #allocation11 [shape = 's32[]', space=sflag, size = 0x4, offset = 0, fixed_abs, tag = 'sflag constant byte address 0x0 - dummy sync flag']
  #allocation12 [shape = 'u32[]', space=smem, size = 0x4, offset = 0x44, fixed_abs, tag = 'smem constant byte address 0x44 - assertion arg 0']
  #allocation13 [shape = 'u32[]', space=smem, size = 0x4, offset = 0x48, fixed_abs, tag = 'smem constant byte address 0x48 - assertion arg 1']
  %s0 = inlined_call_operand.hbm [shape: s32[16], index: 0, kind: input, shape index: {}]
  %s1 = inlined_call_operand.hbm [shape: f32[64,128], index: 1, kind: input, shape index: {}]
  %s2 = inlined_call_operand.hbm [shape: f32[16,128], index: 2, kind: input, shape index: {}]
  %s3 = inlined_call_operand.hbm [shape: f32[16,128], index: 3, kind: output, shape index: {}]
  %s4 = sld [smem:[#allocation0]]
  $region59: #{tpu_custom_call.1} parent=0
    _
  %s6 = ssub.s32 1, %s4
  %s7 = scalar_select 0, %s6, %s4
  %9 = dma.hbm_to_smem %s0, 16, [#allocation5], [#allocation4]
  %10 = dma.done [#allocation4], 16
  %11 = sfence
  $region1: #{tpu_custom_call.1} parent=0
    #allocation6 [shape = 'u8[8192]{0}', space=vmem, size = 0x2000, scoped, tag = 'input window, operand 2']
    #allocation7 [shape = 's32[2]{0}', space=sflag, size = 0x8, scoped, tag = 'scoped memory for tpu_custom_call.1']
    #allocation8 [shape = 's32[2]{0}', space=sflag, size = 0x8, scoped, tag = 'scoped memory for tpu_custom_call.1']
    #allocation9 [shape = 'u8[8192]{0}', space=vmem, size = 0x2000, scoped, tag = 'output window, operand 0']
    %12 = vsyncpa [#allocation7], 0
    %s13 = scalar_lea.sflag [#allocation7], 1
    %14 = vsyncpa %s13, 0
    %15 = vsyncpa [#allocation8], 0
    %s16 = scalar_lea.sflag [#allocation8], 1
    %17 = vsyncpa %s16, 0
    loop: start=0, step=1, limit=4
    $region2: #{tpu_custom_call.1} parent=1 // loop_pre_header
      _
    $region3: #{tpu_custom_call.1} parent=1 // loop_header
      %s19 = sphi 0, %s23
      %p20 = scmp.ge.s32.totalorder %s19, 4
      %s29 = sphi 0, %s31
      %s32 = sphi 0, %s29
      %s33 = sphi 0, %s32
      %s49 = sphi 0, %s33
      %s55 = sphi 0, %s57
      %s58 = sphi 0, %s55
      %s59 = sphi 0, %s58
      %s75 = sphi 0, %s59
    $region4: #{tpu_custom_call.1} parent=1 // loop_header_branch
      %22 = sbr.rel (%p20) target = $region8
    $region5: #{tpu_custom_call.1} parent=1 // loop_body
      %s24 = ssub.s32 %s19, 1
      %s25 = ssub.s32 %s19, 2
      %s26 = sadd.s32 %s19, 1
      %s27 = ssub.s32 %s19, %s26
      %p28 = scmp.eq.s32.totalorder %s27, 0
      %s30 = sadd.s32 %s29, 1
      %s31 = scalar_select %p28, %s29, %s30
      %p34 = pneg %p28
      %p35 = scmp.eq.s32.totalorder %s19, 1
      %p36 = por %p34, %p35
      %p37 = scmp.ne.s32.totalorder %s29, %s32
      %p38 = scmp.eq.s32.totalorder %s19, 0
      %p39 = por %p37, %p38
      %p40 = scmp.ne.s32.totalorder %s29, %s32
      %p41 = scmp.eq.s32.totalorder %s24, 1
      %p42 = por %p40, %p41
      %p43 = scmp.ne.s32.totalorder %s32, %s33
      %p44 = scmp.eq.s32.totalorder %s24, 0
      %p45 = por %p43, %p44
      %p46 = scmp.ne.s32.totalorder %s32, %s33
      %p47 = scmp.eq.s32.totalorder %s25, 1
      %p48 = por %p46, %p47
      %p50 = scmp.ne.s32.totalorder %s33, %s49
      %p51 = scmp.eq.s32.totalorder %s25, 0
      %p52 = por %p50, %p51
      %s53 = ssub.s32 %s19, %s26
      %p54 = scmp.eq.s32.totalorder %s53, 0
      %s56 = sadd.s32 %s55, 1
      %s57 = scalar_select %p54, %s55, %s56
      %p60 = pneg %p54
      %p61 = scmp.eq.s32.totalorder %s19, 1
      %p62 = por %p60, %p61
      %p63 = scmp.ne.s32.totalorder %s55, %s58
      %p64 = scmp.eq.s32.totalorder %s19, 0
      %p65 = por %p63, %p64
      %p66 = scmp.ne.s32.totalorder %s55, %s58
      %p67 = scmp.eq.s32.totalorder %s24, 1
      %p68 = por %p66, %p67
      %p69 = scmp.ne.s32.totalorder %s58, %s59
      %p70 = scmp.eq.s32.totalorder %s24, 0
      %p71 = por %p69, %p70
      %p72 = scmp.ne.s32.totalorder %s58, %s59
      %p73 = scmp.eq.s32.totalorder %s25, 1
      %p74 = por %p72, %p73
      %p76 = scmp.ne.s32.totalorder %s59, %s75
      %p77 = scmp.eq.s32.totalorder %s25, 0
      %p78 = por %p76, %p77
      %p79 = scmp.le.s32.totalorder 1, %s19
      %p80 = scmp.lt.s32.totalorder %s19, 3
      %p81 = pnand %p79, %p80
      %p82 = pneg %p81
      // Predicated region
      $region9: #{tpu_custom_call.1} parent=5 // pred_check
        _
      $region10: #{tpu_custom_call.1} parent=5 // pred_check_branch
        %84 = sbr.rel (%p81) target = $region12
      $region11: #{tpu_custom_call.1} parent=5 // pred_region
        %s85 = ssub.s32 %s19, 1
      $region12: #{tpu_custom_call.1} parent=5 // pred_fallthru
        _
      %p86 = scmp.lt.s32.totalorder %s19, 2
      // Predicated region
      $region13: #{tpu_custom_call.1} parent=5 // pred_check
        %p87 = pneg %p86
      $region14: #{tpu_custom_call.1} parent=5 // pred_check_branch
        %89 = sbr.rel (%p87) target = $region16
      $region15: #{tpu_custom_call.1} parent=5 // pred_region
        // Predicated region
        $region17: #{tpu_custom_call.1} parent=15 // pred_check
          %p90 = pneg %p39
        $region18: #{tpu_custom_call.1} parent=15 // pred_check_branch
          %92 = sbr.rel (%p90) target = $region20
        $region19: #{tpu_custom_call.1} parent=15 // pred_region
          %s93 = sand.u32 %s29, 1
          %s94 = scalar_lea.sflag [#allocation7], %s93
          %s95 = sand.u32 %s29, 1
          %s96 = smul.addr %s95, 8
          %s97 = scalar_lea.vmem [#allocation6], %s96
          %s99 = ssub.s32 128, 128
          %100 = vsyncadd %s94, %s99
          %s101 = smul.addr %s19, 128
          %s102 = scalar_lea.hbm %s2, %s101
          %s104 = sshll.u32 %s97, 4
          %s105 = int_to_ptr.vmem [resolvable:$true] %s104
          %107 = dma.hbm_to_vmem [thread:$0]  %s102, 128, %s105, %s94
        $region20: #{tpu_custom_call.1} parent=15 // pred_fallthru
          _
      $region16: #{tpu_custom_call.1} parent=5 // pred_fallthru
        _
      %p108 = scmp.le.s32.totalorder 1, %s19
      %p109 = scmp.lt.s32.totalorder %s19, 3
      %p110 = pnand %p108, %p109
      %p111 = pneg %p110
      // Predicated region
      $region21: #{tpu_custom_call.1} parent=5 // pred_check
        _
      $region22: #{tpu_custom_call.1} parent=5 // pred_check_branch
        %113 = sbr.rel (%p110) target = $region24
      $region23: #{tpu_custom_call.1} parent=5 // pred_region
        %s114 = ssub.s32 %s19, 1
        %s115 = sand.u32 %s32, 1
        %s116 = scalar_lea.sflag [#allocation7], %s115
        %s117 = sand.u32 %s32, 1
        %s118 = smul.addr %s117, 8
        %s119 = scalar_lea.vmem [#allocation6], %s118
        // Predicated region
        $region25: #{tpu_custom_call.1} parent=23 // pred_check
          %p120 = pneg %p45
        $region26: #{tpu_custom_call.1} parent=23 // pred_check_branch
          %122 = sbr.rel (%p120) target = $region28
        $region27: #{tpu_custom_call.1} parent=23 // pred_region
          %123 = dma.done %s116, 128
        $region28: #{tpu_custom_call.1} parent=23 // pred_fallthru
          _
        %s124 = sand.u32 %s32, 1
        %s125 = scalar_lea.sflag [#allocation7], %s124
        %s126 = sand.u32 %s32, 1
        %s127 = smul.addr %s126, 8
        %s128 = scalar_lea.vmem [#allocation6], %s127
        %p129 = pneg %p45
        %p130 = pneg %p42
        %p131 = pneg %p71
        %p132 = pneg %p68
        %s133 = sand.u32 %s58, 1
        %s134 = scalar_lea.sflag [#allocation8], %s133
        %s135 = sand.u32 %s58, 1
        %s136 = smul.addr %s135, 8
        %s137 = scalar_lea.vmem [#allocation9], %s136
        %s138 = smul.u32 %s24, 8
        loop: start=0, step=1, limit=8
        $region29: #{tpu_custom_call.1} parent=23 // loop_pre_header
          _
        $region30: #{tpu_custom_call.1} parent=23 // loop_header
          %s140 = sphi 0, %s144
          %p141 = scmp.ge.s32.totalorder %s140, 8
        $region31: #{tpu_custom_call.1} parent=23 // loop_header_branch
          %143 = sbr.rel (%p141) target = $region35
        $region32: #{tpu_custom_call.1} parent=23 // loop_body
          %s145 = sadd.s32 %s138, %s140
          %s146 = sld [smem:[#allocation5 + %s145]]
          %s147 = smul.addr %s146, 16
          %s148 = scalar_lea.hbm %s1, %s147
          %s149 = scalar_lea.vmem [#allocation2], %s140
          %s150 = scalar_lea.sflag [#allocation3], %s140
          // Predicated region
          $region36: #{tpu_custom_call.1} parent=32 // pred_check
            _
          $region37: #{tpu_custom_call.1} parent=32 // pred_check_branch
            %152 = sbr.rel target = $region39
          $region38: #{tpu_custom_call.1} parent=32 // pred_region
            %153 = sst [smem:[#allocation12]] [#allocation11]
            %154 = sst [smem:[#allocation13]] [#allocation10]
          $region39: #{tpu_custom_call.1} parent=32 // pred_fallthru
            _
          %156 = shalt.err (0)
          %s158 = sshll.u32 %s149, 4
          %s159 = int_to_ptr.vmem [resolvable:$true] %s158
          %161 = dma.hbm_to_vmem [thread:$0]  %s148, 16, %s159, %s150
        $region33: #{tpu_custom_call.1} parent=23 // loop_footer
          %s144 = sadd.s32 1, %s140
        $region34: #{tpu_custom_call.1} parent=23 // loop_footer_branch
          %139 = sbr.rel target = $region30
        $region35: #{tpu_custom_call.1} parent=23 // loop_exit
          _
        loop: start=0, step=1, limit=8
        $region40: #{tpu_custom_call.1} parent=23 // loop_pre_header
          _
        $region41: #{tpu_custom_call.1} parent=23 // loop_header
          %s163 = sphi 0, %s167
          %p164 = scmp.ge.s32.totalorder %s163, 8
        $region42: #{tpu_custom_call.1} parent=23 // loop_header_branch
          %166 = sbr.rel (%p164) target = $region46
        $region43: #{tpu_custom_call.1} parent=23 // loop_body
          %s168 = scalar_lea.sflag [#allocation3], %s163
          %s169 = smul.u32 1, 1
          %s170 = sshll.u32 %s169, 4
          %171 = dma.done %s168, %s170
        $region44: #{tpu_custom_call.1} parent=23 // loop_footer
          %s167 = sadd.s32 1, %s163
        $region45: #{tpu_custom_call.1} parent=23 // loop_footer_branch
          %162 = sbr.rel target = $region41
        $region46: #{tpu_custom_call.1} parent=23 // loop_exit
          _
        %v172 = vld [vmem:[#allocation2] sm:$0xff]
        %v173 = vld [vmem:[%s119] sm:$0xff]
        %v174 = vadd.f32 %v172, %v173
        %175 = vst [vmem:[%s137] sm:$0xff] %v174
        %s176 = sand.u32 %s58, 1
        %s177 = scalar_lea.sflag [#allocation8], %s176
        %s178 = sand.u32 %s58, 1
        %s179 = smul.addr %s178, 8
        %s180 = scalar_lea.vmem [#allocation9], %s179
        // Predicated region
        $region47: #{tpu_custom_call.1} parent=23 // pred_check
          %p181 = pneg %p68
        $region48: #{tpu_custom_call.1} parent=23 // pred_check_branch
          %183 = sbr.rel (%p181) target = $region50
        $region49: #{tpu_custom_call.1} parent=23 // pred_region
          %s185 = ssub.s32 128, 128
          %186 = vsyncadd %s177, %s185
          %s187 = smul.addr %s24, 128
          %s188 = scalar_lea.hbm %s3, %s187
          %s190 = sshll.u32 %s180, 4
          %s191 = int_to_ptr.vmem [resolvable:$true] %s190
          %193 = dma.vmem_to_hbm [thread:$0]  %s191, 128, %s188, %s177
        $region50: #{tpu_custom_call.1} parent=23 // pred_fallthru
          _
      $region24: #{tpu_custom_call.1} parent=5 // pred_fallthru
        _
      %p194 = scmp.le.s32.totalorder 2, %s19
      // Predicated region
      $region51: #{tpu_custom_call.1} parent=5 // pred_check
        %p195 = pneg %p194
      $region52: #{tpu_custom_call.1} parent=5 // pred_check_branch
        %197 = sbr.rel (%p195) target = $region54
      $region53: #{tpu_custom_call.1} parent=5 // pred_region
        %s198 = ssub.s32 %s19, 2
        // Predicated region
        $region55: #{tpu_custom_call.1} parent=53 // pred_check
          %p199 = pneg %p74
        $region56: #{tpu_custom_call.1} parent=53 // pred_check_branch
          %201 = sbr.rel (%p199) target = $region58
        $region57: #{tpu_custom_call.1} parent=53 // pred_region
          %s202 = sand.u32 %s59, 1
          %s203 = scalar_lea.sflag [#allocation8], %s202
          %s204 = sand.u32 %s59, 1
          %s205 = smul.addr %s204, 8
          %s206 = scalar_lea.vmem [#allocation9], %s205
          %207 = dma.done %s203, 128
        $region58: #{tpu_custom_call.1} parent=53 // pred_fallthru
          _
      $region54: #{tpu_custom_call.1} parent=5 // pred_fallthru
        _
    $region6: #{tpu_custom_call.1} parent=1 // loop_footer
      %s23 = sadd.s32 1, %s19
    $region7: #{tpu_custom_call.1} parent=1 // loop_footer_branch
      %18 = sbr.rel target = $region3
    $region8: #{tpu_custom_call.1} parent=1 // loop_exit
      _
    %208 = vsyncpa [#allocation7], 1
    %s209 = scalar_lea.sflag [#allocation7], 1
    %210 = vsyncpa %s209, 1
    %211 = vsyncpa [#allocation8], 1
    %s212 = scalar_lea.sflag [#allocation8], 1
    %213 = vsyncpa %s212, 1
  %214 = vsyncmov [#allocation3]
  %s215 = vpop.sfrf %214
  %p216 = scmp.eq.s32.totalorder %s215, 0
  %p217 = pneg %p216
  %219 = shalt.err (%p217)
  %s220 = scalar_lea.sflag [#allocation3], 1
  %221 = vsyncmov %s220
  %s222 = vpop.sfrf %221
  %p223 = scmp.eq.s32.totalorder %s222, 0
  %p224 = pneg %p223
  %226 = shalt.err (%p224)
  %s227 = scalar_lea.sflag [#allocation3], 2
  %228 = vsyncmov %s227
  %s229 = vpop.sfrf %228
  %p230 = scmp.eq.s32.totalorder %s229, 0
  %p231 = pneg %p230
  %233 = shalt.err (%p231)
  %s234 = scalar_lea.sflag [#allocation3], 3
  %235 = vsyncmov %s234
  %s236 = vpop.sfrf %235
  %p237 = scmp.eq.s32.totalorder %s236, 0
  %p238 = pneg %p237
  %240 = shalt.err (%p238)
  %s241 = scalar_lea.sflag [#allocation3], 4
  %242 = vsyncmov %s241
  %s243 = vpop.sfrf %242
  %p244 = scmp.eq.s32.totalorder %s243, 0
  %p245 = pneg %p244
  %247 = shalt.err (%p245)
  %s248 = scalar_lea.sflag [#allocation3], 5
  %249 = vsyncmov %s248
  %s250 = vpop.sfrf %249
  %p251 = scmp.eq.s32.totalorder %s250, 0
  %p252 = pneg %p251
  %254 = shalt.err (%p252)
  %s255 = scalar_lea.sflag [#allocation3], 6
  %256 = vsyncmov %s255
  %s257 = vpop.sfrf %256
  %p258 = scmp.eq.s32.totalorder %s257, 0
  %p259 = pneg %p258
  %261 = shalt.err (%p259)
  %s262 = scalar_lea.sflag [#allocation3], 7
  %263 = vsyncmov %s262
  %s264 = vpop.sfrf %263
  %p265 = scmp.eq.s32.totalorder %s264, 0
  %p266 = pneg %p265
  %268 = shalt.err (%p266)

</llo_original>
